<compile_context>
chip_gen: v7x
topology: tpu7x:2x2x1
jax: 0.10.0
libtpu: 0.0.40
codegen_flags: <defaults>
</compile_context>

<pallas_src>
import jax
import jax.numpy as jnp
import numpy as np
from jax import lax
from jax.experimental import pallas as pl
from jax.experimental.pallas import tpu as pltpu


_TILE_VMEM_BUDGET = 20 * 1024 * 1024   # per-step working-set target (all gens)
_VMEM_LIMIT_BYTES = 48 * 1024 * 1024   # scoped VMEM limit; < v7x 64 MiB physical


def _round_up(a, b):
    return (a + b - 1) // b * b


def _conv3x3_mm_kernel(w_ref, p_ref, b_ref, o_ref, acc_ref):
    # w_ref:   (co_tile, k_tile)       flattened conv-weight tile
    # p_ref:   (k_tile, hw_tile)       im2col patches tile (lane dim = H*W)
    # b_ref:   (co_tile, 1)            f32 bias
    # o_ref:   (co_tile, hw_tile)      lane-dense output tile
    # acc_ref: (co_tile, hw_tile) f32  accumulator, persists across the K axis
    k = pl.program_id(3)

    @pl.when(k == 0)
    def _():
        acc_ref[...] = jnp.zeros_like(acc_ref)

    acc_ref[...] += jnp.dot(w_ref[...], p_ref[...],
                            preferred_element_type=jnp.float32)

    @pl.when(k == pl.num_programs(3) - 1)
    def _():
        o_ref[...] = (acc_ref[...] + b_ref[...]).astype(o_ref.dtype)


def _pick_tiles(N, C_out, K, HW_pad, bytes_c, bytes_o,
                budget=_TILE_VMEM_BUDGET):
    # --- C_out tile: prefer 256-aligned (v6e/v7x MXU output width) -------------
    if C_out <= 256:
        co_tile = C_out                    # whole-dim block is always legal
    elif C_out % 256 == 0:
        co_tile = 256
    elif C_out % 128 == 0:
        co_tile = 128
    else:
        co_tile = C_out

    # --- K tile: keep whole when modest; otherwise tile (multiple of 128) ------
    if K <= 2048:
        k_tile, K_pad = K, K
    else:
        k_tile = 512
        for c in range(1536, 0, -128):     # largest <=1536 mult-of-128 divisor
            if K % c == 0:
                k_tile = c
                break
        K_pad = _round_up(K, k_tile)

    # --- HW tile: largest multiple of 128 dividing HW_pad within the budget ----
    def fits(hw):
        per_step = 2 * (co_tile * k_tile * bytes_c      # weight (double-buffered)
                        + k_tile * hw * bytes_c         # patches
                        + co_tile * hw * bytes_o        # output
                        + co_tile * 4)                  # bias
        per_step += co_tile * hw * 4                    # f32 accumulator scratch
        return per_step <= budget

    hw_tile = 128
    for c in range(HW_pad, 127, -128):
        if HW_pad % c == 0 and fits(c):
            hw_tile = c
            break

    # Keep >= 2 parallel grid steps so v7x's second TensorCore is not idle.
    if N * (HW_pad // hw_tile) * (C_out // co_tile) < 2 and hw_tile > 128:
        for c in range(hw_tile - 128, 127, -128):
            if HW_pad % c == 0:
                hw_tile = c
                break

    return co_tile, k_tile, K_pad, hw_tile


def conv3x3(x, weight, bias, use_refl=True, compute_dtype=jnp.bfloat16):
    """ReflectionPad2d(1) + Conv2d(C_in, C_out, 3), stride 1 (PyTorch Conv3x3).

    x:      (N, C_in, H, W)
    weight: (C_out, C_in, 3, 3)   (PyTorch OIHW)
    bias:   (C_out,)
    compute_dtype: MXU operand dtype (default bf16; accumulation stays f32).
                   Pass jnp.float32 (or None) for full-precision compute.
    """
    N, C_in, H, W = x.shape
    C_out = weight.shape[0]
    K = 9 * C_in
    HW = H * W
    HW_pad = _round_up(HW, 128)            # lane-dense stores, bounded tiles

    # --- wrapper glue: reflect/zero pad + im2col (XLA) --------------------------
    pad_mode = "reflect" if use_refl else "constant"
    x_pad = jnp.pad(x, ((0, 0), (0, 0), (1, 1), (1, 1)), mode=pad_mode)
    # Row order must match weight.reshape(C_out, C_in*9): k = ci*9 + kh*3 + kw.
    taps = [x_pad[:, :, kh:kh + H, kw:kw + W]
            for kh in range(3) for kw in range(3)]          # 9 x (N, C_in, H, W)
    patches = jnp.stack(taps, axis=2).reshape(N, K, HW)     # (N, 9*C_in, H*W)
    # TODO(synk): for large activations with small C_in, replace the materialized
    # im2col (a ~9x HBM blow-up) with in-kernel halo loads of (C_in, h_tile+2, W)
    # row blocks and 9 shifted accumulating dots.

    w_flat = weight.reshape(C_out, K)
    bias2d = bias.reshape(C_out, 1).astype(jnp.float32)

    if compute_dtype is not None:
        patches = patches.astype(compute_dtype)
        w_flat = w_flat.astype(compute_dtype)

    bytes_c = jnp.dtype(patches.dtype).itemsize
    bytes_o = jnp.dtype(x.dtype).itemsize

    co_tile, k_tile, K_pad, hw_tile = _pick_tiles(
        N, C_out, K, HW_pad, bytes_c, bytes_o)

    # Zero-pad K / HW (zeros contribute nothing; padded HW lanes are sliced off).
    if K_pad != K or HW_pad != HW:
        patches = jnp.pad(patches, ((0, 0), (0, K_pad - K), (0, HW_pad - HW)))
    if K_pad != K:
        w_flat = jnp.pad(w_flat, ((0, 0), (0, K_pad - K)))

    grid = (N, HW_pad // hw_tile, C_out // co_tile, K_pad // k_tile)

    out = pl.pallas_call(
        _conv3x3_mm_kernel,
        out_shape=jax.ShapeDtypeStruct((N, C_out, HW_pad), x.dtype),
        grid_spec=pltpu.PrefetchScalarGridSpec(
            num_scalar_prefetch=0,
            grid=grid,
            in_specs=[
                # weight: re-streamed across the (inner) C_out sweep — it is small.
                pl.BlockSpec((co_tile, k_tile), lambda n, j, i, k: (i, k)),
                # patches: block index constant across the C_out sweep (when K is
                # untiled) -> DMA'd from HBM once per (n, hw_tile).
                pl.BlockSpec((None, k_tile, hw_tile), lambda n, j, i, k: (n, k, j)),
                pl.BlockSpec((co_tile, 1), lambda n, j, i, k: (i, 0)),
            ],
            out_specs=pl.BlockSpec((None, co_tile, hw_tile),
                                   lambda n, j, i, k: (n, i, j)),
            scratch_shapes=[pltpu.VMEM((co_tile, hw_tile), jnp.float32)],
        ),
        compiler_params=pltpu.CompilerParams(
            dimension_semantics=("parallel", "parallel", "parallel", "arbitrary"),
            vmem_limit_bytes=_VMEM_LIMIT_BYTES),
    )(w_flat, patches, bias2d)

    if HW_pad != HW:
        out = out[:, :, :HW]
    return out.reshape(N, C_out, H, W)      # free reshape, no transpose needed


if __name__ == "__main__":
    key = jax.random.PRNGKey(0)
    k_x, k_w, k_b = jax.random.split(key, 3)

    N, C_in, C_out, H, W = 2, 4, 8, 16, 16

    x = jax.random.normal(k_x, (N, C_in, H, W), dtype=jnp.float32)
    # Deterministic init mimicking PyTorch Conv2d's uniform(-bound, bound).
    fan_in = C_in * 3 * 3
    bound = 1.0 / np.sqrt(fan_in)
    weight = jax.random.uniform(k_w, (C_out, C_in, 3, 3),
                                minval=-bound, maxval=bound, dtype=jnp.float32)
    bias = jax.random.uniform(k_b, (C_out,),
                              minval=-bound, maxval=bound, dtype=jnp.float32)

    # Default path: bf16 MXU compute with f32 accumulation.
    out_bf16 = jax.block_until_ready(conv3x3(x, weight, bias))
    # f32 compute path for a tight numerical check.
    out_f32 = jax.block_until_ready(
        conv3x3(x, weight, bias, compute_dtype=jnp.float32))

    # Reference: reflect-pad + VALID conv (identical semantics to the PyTorch module).
    x_pad = jnp.pad(x, ((0, 0), (0, 0), (1, 1), (1, 1)), mode="reflect")
    ref = lax.conv_general_dilated(
        x_pad, weight, window_strides=(1, 1), padding="VALID",
        dimension_numbers=("NCHW", "OIHW", "NCHW"),
    ) + bias.reshape(1, C_out, 1, 1)
    ref = jax.block_until_ready(ref)

    assert out_bf16.shape == (N, C_out, H, W)
    np.testing.assert_allclose(np.asarray(out_f32), np.asarray(ref),
                               rtol=1e-4, atol=1e-4)
    # bf16 operands -> looser tolerance (expected bf16 numerics, not a bug).
    np.testing.assert_allclose(np.asarray(out_bf16), np.asarray(ref),
                               rtol=2e-2, atol=2e-2)
    print("KERNEL_OK")
</pallas_src>

<mosaic_0001>
module attributes {stable_mosaic.version = 11 : i64} {
  func.func @_conv3x3_mm_kernel(%arg0: i32, %arg1: i32, %arg2: i32, %arg3: i32, %arg4: memref<8x36xbf16, #tpu.memory_space<vmem>>, %arg5: memref<1x36x256xbf16, #tpu.memory_space<vmem>>, %arg6: memref<8x1xf32, #tpu.memory_space<vmem>>, %arg7: memref<1x8x256xf32, #tpu.memory_space<vmem>>, %arg8: memref<8x256xf32, #tpu.memory_space<vmem>>) attributes {dimension_semantics = [#tpu.dimension_semantics<parallel>, #tpu.dimension_semantics<parallel>, #tpu.dimension_semantics<parallel>, #tpu.dimension_semantics<arbitrary>], iteration_bounds = array<i64: 2, 1, 1, 1>, scalar_prefetch = 0 : i64, scratch_operands = 1 : i64, tpu.core_type = #tpu.core_type<tc>, window_params = [{transform_indices = @transform_0, window_bounds = array<i64: 8, 36>}, {transform_indices = @transform_1, window_bounds = array<i64: 1, 36, 256>}, {transform_indices = @transform_2, window_bounds = array<i64: 8, 1>}, {transform_indices = @transform_3, window_bounds = array<i64: 1, 8, 256>}]} {
    %c0_i32 = arith.constant 0 : i32
    %0 = arith.cmpi eq, %arg3, %c0_i32 : i32
    %1 = arith.extui %0 : i1 to i32
    %c0_i32_0 = arith.constant 0 : i32
    %2 = arith.cmpi ne, %1, %c0_i32_0 : i32
    scf.if %2 {
      %cst_11 = arith.constant 0.000000e+00 : f32
      %13 = vector.broadcast %cst_11 : f32 to vector<8x256xf32>
      %c0_12 = arith.constant 0 : index
      %c0_13 = arith.constant 0 : index
      %14 = vector.load %arg8[%c0_12, %c0_13] : memref<8x256xf32, #tpu.memory_space<vmem>>, vector<8x256xf32>
      tpu.vector_store %arg8[%c0_12, %c0_13], %13 {strides = array<i32>} : memref<8x256xf32, #tpu.memory_space<vmem>>, vector<8x256xf32>,
    } else {
    }
    %c0 = arith.constant 0 : index
    %c0_1 = arith.constant 0 : index
    %3 = vector.load %arg8[%c0, %c0_1] : memref<8x256xf32, #tpu.memory_space<vmem>>, vector<8x256xf32>
    %c0_2 = arith.constant 0 : index
    %c0_3 = arith.constant 0 : index
    %4 = vector.load %arg4[%c0_2, %c0_3] : memref<8x36xbf16, #tpu.memory_space<vmem>>, vector<8x36xbf16>
    %c0_4 = arith.constant 0 : index
    %c0_5 = arith.constant 0 : index
    %c0_6 = arith.constant 0 : index
    %5 = vector.load %arg5[%c0_4, %c0_5, %c0_6] : memref<1x36x256xbf16, #tpu.memory_space<vmem>>, vector<1x36x256xbf16>
    %6 = vector.shape_cast %5 : vector<1x36x256xbf16> to vector<36x256xbf16>
    %cst = arith.constant dense<0.000000e+00> : vector<8x256xf32>
    %7 = tpu.matmul %4, %6, %cst {dimension_numbers = #tpu.dot_dimension_numbers<[1], [0], [0], [1], [0, 0, 1, 1], [], []>} : vector<8x36xbf16>, vector<36x256xbf16>, vector<8x256xf32> -> vector<8x256xf32>
    %8 = arith.addf %3, %7 : vector<8x256xf32>
    %c0_7 = arith.constant 0 : index
    %c0_8 = arith.constant 0 : index
    %9 = vector.load %arg8[%c0_7, %c0_8] : memref<8x256xf32, #tpu.memory_space<vmem>>, vector<8x256xf32>
    tpu.vector_store %arg8[%c0_7, %c0_8], %8 {strides = array<i32>} : memref<8x256xf32, #tpu.memory_space<vmem>>, vector<8x256xf32>,
    %c0_i32_9 = arith.constant 0 : i32
    %10 = arith.cmpi eq, %arg3, %c0_i32_9 : i32
    %11 = arith.extui %10 : i1 to i32
    %c0_i32_10 = arith.constant 0 : i32
    %12 = arith.cmpi ne, %11, %c0_i32_10 : i32
    scf.if %12 {
      %c0_11 = arith.constant 0 : index
      %c0_12 = arith.constant 0 : index
      %13 = vector.load %arg8[%c0_11, %c0_12] : memref<8x256xf32, #tpu.memory_space<vmem>>, vector<8x256xf32>
      %c0_13 = arith.constant 0 : index
      %c0_14 = arith.constant 0 : index
      %14 = vector.load %arg6[%c0_13, %c0_14] : memref<8x1xf32, #tpu.memory_space<vmem>>, vector<8x1xf32>
      %15 = vector.broadcast %14 : vector<8x1xf32> to vector<8x256xf32>
      %16 = arith.addf %13, %15 : vector<8x256xf32>
      %c0_15 = arith.constant 0 : index
      %c0_16 = arith.constant 0 : index
      %c0_17 = arith.constant 0 : index
      %17 = vector.load %arg7[%c0_15, %c0_16, %c0_17] : memref<1x8x256xf32, #tpu.memory_space<vmem>>, vector<1x8x256xf32>
      %18 = vector.shape_cast %17 : vector<1x8x256xf32> to vector<8x256xf32>
      %19 = vector.shape_cast %16 : vector<8x256xf32> to vector<1x8x256xf32>
      tpu.vector_store %arg7[%c0_15, %c0_16, %c0_17], %19 {strides = array<i32>} : memref<1x8x256xf32, #tpu.memory_space<vmem>>, vector<1x8x256xf32>,
    } else {
    }
    return
  }
  func.func @transform_0(%arg0: i32, %arg1: i32, %arg2: i32, %arg3: i32) -> (i32, i32) {
    %c0_i32 = arith.constant 0 : i32
    return %arg2, %arg3 : i32, i32
  }
  func.func @transform_1(%arg0: i32, %arg1: i32, %arg2: i32, %arg3: i32) -> (i32, i32, i32) {
    %c0_i32 = arith.constant 0 : i32
    return %arg0, %arg3, %arg1 : i32, i32, i32
  }
  func.func @transform_2(%arg0: i32, %arg1: i32, %arg2: i32, %arg3: i32) -> (i32, i32) {
    %c0_i32 = arith.constant 0 : i32
    %c0_i32_0 = arith.constant 0 : i32
    return %arg2, %c0_i32 : i32, i32
  }
  func.func @transform_3(%arg0: i32, %arg1: i32, %arg2: i32, %arg3: i32) -> (i32, i32, i32) {
    %c0_i32 = arith.constant 0 : i32
    return %arg0, %arg2, %arg1 : i32, i32, i32
  }
}

</mosaic_0001>

<llo_original>
// kernel: tpu_custom_call.1
$region0: #{tpu_custom_call.1}
  #allocation0 [shape = 'u32[]', space=smem, size = 0x4, offset = 0x4, fixed_abs, tag = 'smem constant byte address 0x4 - core index']
  #allocation1 [shape = 'u32[144,128]{1,0:T(1,128)}', space=vmem, size = 0x12000, scoped, tag = 'internal scratch']
  #allocation2 [shape = 'f32[8,256]{1,0:T(8,128)}', space=vmem, size = 0x2000, scoped, tag = 'scratch operand']
  %s0 = inlined_call_operand.vmem [shape: bf16[8,36], index: 0, kind: input, shape index: {}]
  %s1 = inlined_call_operand.vmem [shape: bf16[2,36,256], index: 1, kind: input, shape index: {}]
  %s2 = inlined_call_operand.vmem [shape: f32[8,1], index: 2, kind: input, shape index: {}]
  %s3 = inlined_call_operand.hbm [shape: f32[2,8,256], index: 3, kind: output, shape index: {}]
  %s4 = sld [smem:[#allocation0]]
  $region53: #{tpu_custom_call.1} parent=0
    _
  %s6 = ssub.s32 1, %s4
  %s7 = scalar_select 0, %s6, %s4
  $region1: #{tpu_custom_call.1} parent=0
    #allocation3 [shape = 'u8[16384]{0}', space=vmem, size = 0x4000, scoped, tag = 'output window, operand 0']
    #allocation4 [shape = 's32[2]{0}', space=sflag, size = 0x8, scoped, tag = 'scoped memory for tpu_custom_call.1']
    %8 = vsyncpa [#allocation4], 0
    %s9 = scalar_lea.sflag [#allocation4], 1
    %10 = vsyncpa %s9, 0
    loop: start=0, step=1, limit=4
    $region2: #{tpu_custom_call.1} parent=1 // loop_pre_header
      _
    $region3: #{tpu_custom_call.1} parent=1 // loop_header
      %s12 = sphi 0, %s16
      %p13 = scmp.ge.s32.totalorder %s12, 4
      %s19 = sphi 0, %s45
      %s20 = sphi 0, %s41
      %s21 = sphi 0, %s37
      %s22 = sphi 0, %s33
      %s23 = sphi 0, %s19
      %s24 = sphi 0, %s20
      %s25 = sphi 0, %s21
      %s26 = sphi 0, %s22
      %s27 = sphi 0, %s23
      %s28 = sphi 0, %s24
      %s29 = sphi 0, %s25
      %s30 = sphi 0, %s26
      %s50 = sphi 0, %s52
      %s53 = sphi 0, %s50
      %s54 = sphi 0, %s53
      %s70 = sphi 0, %s54
      %s80 = sphi 0, %s82
      %s83 = sphi 0, %s80
      %s84 = sphi 0, %s83
      %s100 = sphi 0, %s84
      %s106 = sphi 0, %s108
      %s109 = sphi 0, %s106
      %s110 = sphi 0, %s109
      %s126 = sphi 0, %s110
      %s136 = sphi 0, %s138
      %s139 = sphi 0, %s136
      %s140 = sphi 0, %s139
      %s156 = sphi 0, %s140
    $region4: #{tpu_custom_call.1} parent=1 // loop_header_branch
      %15 = sbr.rel (%p13) target = $region8
    $region5: #{tpu_custom_call.1} parent=1 // loop_body
      %s17 = ssub.s32 %s12, 1
      %s18 = ssub.s32 %s12, 2
      %s31 = sadd.s32 1, %s22
      %p32 = scmp.ge.s32.totalorder %s31, 1
      %s33 = scalar_select %p32, 0, %s31
      %s34 = sadd.s32 1, %s21
      %s35 = scalar_select %p32, %s34, %s21
      %p36 = scmp.ge.s32.totalorder %s35, 1
      %s37 = scalar_select %p36, 0, %s35
      %s38 = sadd.s32 1, %s20
      %s39 = scalar_select %p36, %s38, %s20
      %p40 = scmp.ge.s32.totalorder %s39, 1
      %s41 = scalar_select %p40, 0, %s39
      %s42 = sadd.s32 1, %s19
      %s43 = scalar_select %p40, %s42, %s19
      %p44 = scmp.ge.s32.totalorder %s43, 2
      %s45 = scalar_select %p44, 0, %s43
      %s46 = ssub.s32 %s21, %s37
      %s47 = ssub.s32 %s22, %s33
      %s48 = sor.u32 %s46, %s47
      %p49 = scmp.eq.s32.totalorder %s48, 0
      %s51 = sadd.s32 %s50, 1
      %s52 = scalar_select %p49, %s50, %s51
      %p55 = pneg %p49
      %p56 = scmp.eq.s32.totalorder %s12, 1
      %p57 = por %p55, %p56
      %p58 = scmp.ne.s32.totalorder %s50, %s53
      %p59 = scmp.eq.s32.totalorder %s12, 0
      %p60 = por %p58, %p59
      %p61 = scmp.ne.s32.totalorder %s50, %s53
      %p62 = scmp.eq.s32.totalorder %s17, 1
      %p63 = por %p61, %p62
      %p64 = scmp.ne.s32.totalorder %s53, %s54
      %p65 = scmp.eq.s32.totalorder %s17, 0
      %p66 = por %p64, %p65
      %p67 = scmp.ne.s32.totalorder %s53, %s54
      %p68 = scmp.eq.s32.totalorder %s18, 1
      %p69 = por %p67, %p68
      %p71 = scmp.ne.s32.totalorder %s54, %s70
      %p72 = scmp.eq.s32.totalorder %s18, 0
      %p73 = por %p71, %p72
      %s74 = ssub.s32 %s19, %s45
      %s75 = ssub.s32 %s22, %s33
      %s76 = sor.u32 %s74, %s75
      %s77 = ssub.s32 %s20, %s41
      %s78 = sor.u32 %s76, %s77
      %p79 = scmp.eq.s32.totalorder %s78, 0
      %s81 = sadd.s32 %s80, 1
      %s82 = scalar_select %p79, %s80, %s81
      %p85 = pneg %p79
      %p86 = scmp.eq.s32.totalorder %s12, 1
      %p87 = por %p85, %p86
      %p88 = scmp.ne.s32.totalorder %s80, %s83
      %p89 = scmp.eq.s32.totalorder %s12, 0
      %p90 = por %p88, %p89
      %p91 = scmp.ne.s32.totalorder %s80, %s83
      %p92 = scmp.eq.s32.totalorder %s17, 1
      %p93 = por %p91, %p92
      %p94 = scmp.ne.s32.totalorder %s83, %s84
      %p95 = scmp.eq.s32.totalorder %s17, 0
      %p96 = por %p94, %p95
      %p97 = scmp.ne.s32.totalorder %s83, %s84
      %p98 = scmp.eq.s32.totalorder %s18, 1
      %p99 = por %p97, %p98
      %p101 = scmp.ne.s32.totalorder %s84, %s100
      %p102 = scmp.eq.s32.totalorder %s18, 0
      %p103 = por %p101, %p102
      %s104 = ssub.s32 %s21, %s37
      %p105 = scmp.eq.s32.totalorder %s104, 0
      %s107 = sadd.s32 %s106, 1
      %s108 = scalar_select %p105, %s106, %s107
      %p111 = pneg %p105
      %p112 = scmp.eq.s32.totalorder %s12, 1
      %p113 = por %p111, %p112
      %p114 = scmp.ne.s32.totalorder %s106, %s109
      %p115 = scmp.eq.s32.totalorder %s12, 0
      %p116 = por %p114, %p115
      %p117 = scmp.ne.s32.totalorder %s106, %s109
      %p118 = scmp.eq.s32.totalorder %s17, 1
      %p119 = por %p117, %p118
      %p120 = scmp.ne.s32.totalorder %s109, %s110
      %p121 = scmp.eq.s32.totalorder %s17, 0
      %p122 = por %p120, %p121
      %p123 = scmp.ne.s32.totalorder %s109, %s110
      %p124 = scmp.eq.s32.totalorder %s18, 1
      %p125 = por %p123, %p124
      %p127 = scmp.ne.s32.totalorder %s110, %s126
      %p128 = scmp.eq.s32.totalorder %s18, 0
      %p129 = por %p127, %p128
      %s130 = ssub.s32 %s19, %s45
      %s131 = ssub.s32 %s21, %s37
      %s132 = sor.u32 %s130, %s131
      %s133 = ssub.s32 %s20, %s41
      %s134 = sor.u32 %s132, %s133
      %p135 = scmp.eq.s32.totalorder %s134, 0
      %s137 = sadd.s32 %s136, 1
      %s138 = scalar_select %p135, %s136, %s137
      %p141 = pneg %p135
      %p142 = scmp.eq.s32.totalorder %s12, 1
      %p143 = por %p141, %p142
      %p144 = scmp.ne.s32.totalorder %s136, %s139
      %p145 = scmp.eq.s32.totalorder %s12, 0
      %p146 = por %p144, %p145
      %p147 = scmp.ne.s32.totalorder %s136, %s139
      %p148 = scmp.eq.s32.totalorder %s17, 1
      %p149 = por %p147, %p148
      %p150 = scmp.ne.s32.totalorder %s139, %s140
      %p151 = scmp.eq.s32.totalorder %s17, 0
      %p152 = por %p150, %p151
      %p153 = scmp.ne.s32.totalorder %s139, %s140
      %p154 = scmp.eq.s32.totalorder %s18, 1
      %p155 = por %p153, %p154
      %p157 = scmp.ne.s32.totalorder %s140, %s156
      %p158 = scmp.eq.s32.totalorder %s18, 0
      %p159 = por %p157, %p158
      %p160 = scmp.le.s32.totalorder 1, %s12
      %p161 = scmp.lt.s32.totalorder %s12, 3
      %p162 = pnand %p160, %p161
      %p163 = pneg %p162
      // Predicated region
      $region9: #{tpu_custom_call.1} parent=5 // pred_check
        _
      $region10: #{tpu_custom_call.1} parent=5 // pred_check_branch
        %165 = sbr.rel (%p162) target = $region12
      $region11: #{tpu_custom_call.1} parent=5 // pred_region
        %s166 = ssub.s32 %s12, 1
        // Predicated region
        $region13: #{tpu_custom_call.1} parent=11 // pred_check
          %p167 = pneg %p66
        $region14: #{tpu_custom_call.1} parent=11 // pred_check_branch
          %169 = sbr.rel (%p167) target = $region16
        $region15: #{tpu_custom_call.1} parent=11 // pred_region
          %p170 = scmp.lt.s32.totalorder %s25, 0
          %s171 = scalar_select %p170, %s25, 0
          %p172 = scmp.lt.s32.totalorder %s26, 0
          %s173 = scalar_select %p172, %s26, 0
          %s174 = sadd.s32 %s173, %s171
          %s175 = smul.addr %s174, 4
          %s176 = scalar_lea.vmem %s0, %s175
        $region16: #{tpu_custom_call.1} parent=11 // pred_fallthru
          _
        // Predicated region
        $region17: #{tpu_custom_call.1} parent=11 // pred_check
          %p177 = pneg %p122
        $region18: #{tpu_custom_call.1} parent=11 // pred_check_branch
          %179 = sbr.rel (%p177) target = $region20
        $region19: #{tpu_custom_call.1} parent=11 // pred_region
          %p180 = scmp.lt.s32.totalorder %s25, 0
          %s181 = scalar_select %p180, %s25, 0
          %s182 = smul.addr %s181, 8
          %s183 = scalar_lea.vmem %s2, %s182
        $region20: #{tpu_custom_call.1} parent=11 // pred_fallthru
          _
      $region12: #{tpu_custom_call.1} parent=5 // pred_fallthru
        _
      %p184 = scmp.lt.s32.totalorder %s12, 2
      // Predicated region
      $region21: #{tpu_custom_call.1} parent=5 // pred_check
        %p185 = pneg %p184
      $region22: #{tpu_custom_call.1} parent=5 // pred_check_branch
        %187 = sbr.rel (%p185) target = $region24
      $region23: #{tpu_custom_call.1} parent=5 // pred_region
        // Predicated region
        $region25: #{tpu_custom_call.1} parent=23 // pred_check
          %p188 = pneg %p90
        $region26: #{tpu_custom_call.1} parent=23 // pred_check_branch
          %190 = sbr.rel (%p188) target = $region28
        $region27: #{tpu_custom_call.1} parent=23 // pred_region
          %s191 = smul.u32 5, %s22
          %s192 = smul.u32 2, %s20
          %p193 = scmp.lt.s32.totalorder %s19, 1
          %s194 = scalar_select %p193, %s19, 1
          %p195 = scmp.lt.s32.totalorder %s191, 4
          %s196 = scalar_select %p195, %s191, 4
          %p197 = scmp.lt.s32.totalorder %s192, 1
          %s198 = scalar_select %p197, %s192, 1
          %s199 = smul.addr %s196, 2
          %s200 = sadd.s32 %s198, %s199
          %s201 = smul.addr %s194, 10
          %s202 = sadd.s32 %s200, %s201
          %s203 = smul.addr %s202, 4
          %s204 = scalar_lea.vmem %s1, %s203
          %s205 = smul.u32 5, %s22
          %s206 = smul.u32 2, %s20
        $region28: #{tpu_custom_call.1} parent=23 // pred_fallthru
          _
      $region24: #{tpu_custom_call.1} parent=5 // pred_fallthru
        _
      %p207 = scmp.le.s32.totalorder 1, %s12
      %p208 = scmp.lt.s32.totalorder %s12, 3
      %p209 = pnand %p207, %p208
      %p210 = pneg %p209
      // Predicated region
      $region29: #{tpu_custom_call.1} parent=5 // pred_check
        _
      $region30: #{tpu_custom_call.1} parent=5 // pred_check_branch
        %212 = sbr.rel (%p209) target = $region32
      $region31: #{tpu_custom_call.1} parent=5 // pred_region
        %s213 = ssub.s32 %s12, 1
        %p214 = scmp.lt.s32.totalorder %s25, 0
        %s215 = scalar_select %p214, %s25, 0
        %p216 = scmp.lt.s32.totalorder %s26, 0
        %s217 = scalar_select %p216, %s26, 0
        %s218 = sadd.s32 %s217, %s215
        %s219 = smul.addr %s218, 4
        %s220 = scalar_lea.vmem %s0, %s219
        %p221 = pneg %p66
        %p222 = pneg %p63
        %s223 = smul.u32 5, %s26
        %s224 = smul.u32 2, %s24
        %p225 = scmp.lt.s32.totalorder %s23, 1
        %s226 = scalar_select %p225, %s23, 1
        %p227 = scmp.lt.s32.totalorder %s223, 4
        %s228 = scalar_select %p227, %s223, 4
        %p229 = scmp.lt.s32.totalorder %s224, 1
        %s230 = scalar_select %p229, %s224, 1
        %s231 = smul.addr %s228, 2
        %s232 = sadd.s32 %s230, %s231
        %s233 = smul.addr %s226, 10
        %s234 = sadd.s32 %s232, %s233
        %s235 = smul.addr %s234, 4
        %s236 = scalar_lea.vmem %s1, %s235
        %p237 = pneg %p96
        %p238 = pneg %p93
        %p239 = scmp.lt.s32.totalorder %s25, 0
        %s240 = scalar_select %p239, %s25, 0
        %s241 = smul.addr %s240, 8
        %s242 = scalar_lea.vmem %s2, %s241
        %p243 = pneg %p122
        %p244 = pneg %p119
        %p245 = pneg %p152
        %p246 = pneg %p149
        %s247 = sand.u32 %s139, 1
        %s248 = scalar_lea.sflag [#allocation4], %s247
        %s249 = sand.u32 %s139, 1
        %s250 = smul.addr %s249, 16
        %s251 = scalar_lea.vmem [#allocation3], %s250
        %p252 = scmp.lt.s32.totalorder %s25, 0
        %s253 = scalar_select %p252, %s25, 0
        %p254 = scmp.lt.s32.totalorder %s26, 0
        %s255 = scalar_select %p254, %s26, 0
        %s256 = sadd.s32 %s255, %s253
        %s257 = smul.addr %s256, 4
        %s258 = scalar_lea.vmem %s0, %s257
        %s259 = smul.u32 5, %s26
        %s260 = smul.u32 2, %s24
        %p261 = scmp.lt.s32.totalorder %s23, 1
        %s262 = scalar_select %p261, %s23, 1
        %p263 = scmp.lt.s32.totalorder %s259, 4
        %s264 = scalar_select %p263, %s259, 4
        %p265 = scmp.lt.s32.totalorder %s260, 1
        %s266 = scalar_select %p265, %s260, 1
        %s267 = smul.addr %s264, 2
        %s268 = sadd.s32 %s266, %s267
        %s269 = smul.addr %s262, 10
        %s270 = sadd.s32 %s268, %s269
        %s271 = smul.addr %s270, 4
        %s272 = scalar_lea.vmem %s1, %s271
        %s273 = smul.u32 5, %s26
        %s274 = smul.u32 2, %s24
        %p275 = scmp.lt.s32.totalorder %s25, 0
        %s276 = scalar_select %p275, %s25, 0
        %s277 = smul.addr %s276, 8
        %s278 = scalar_lea.vmem %s2, %s277
        %s279 = smul.u32 2, %s24
        %p281 = scmp.eq.s32.totalorder %s26, 0
        // Predicated region
        $region33: #{tpu_custom_call.1} parent=31 // pred_check
          %p282 = pneg %p281
        $region34: #{tpu_custom_call.1} parent=31 // pred_check_branch
          %284 = sbr.rel (%p282) target = $region36
        $region35: #{tpu_custom_call.1} parent=31 // pred_region
          %285 = vst [vmem:[#allocation2] sm:$0xff] 0.0
          %286 = vst [vmem:[#allocation2 + $0x8] sm:$0xff] 0.0
        $region36: #{tpu_custom_call.1} parent=31 // pred_fallthru
          _
        %v287 = vld [vmem:[#allocation2] sm:$0xff]
        %v288 = vld [vmem:[#allocation2 + $0x8] sm:$0xff]
        %v289 = vld [vmem:[%s258] sm:$0xf]
        %v290 = vld [vmem:[%s272] sm:$0xff]
        %v291 = vld [vmem:[%s272 + $0x8] sm:$0xff]
        %v292 = vld [vmem:[%s272 + $0x10] sm:$0xff]
        %v293 = vld [vmem:[%s272 + $0x18] sm:$0xff]
        %v294 = vld [vmem:[%s272 + $0x20] sm:$0x33]
        %v300 = vunpack.c.l.b16 %v290
        %v301 = vunpack.c.h.b16 %v290
        %v302 = vunpack.c.l.b16 %v291
        %v303 = vunpack.c.h.b16 %v291
        %v304 = vunpack.c.l.b16 %v292
        %v305 = vunpack.c.h.b16 %v292
        %v306 = vunpack.c.l.b16 %v293
        %v307 = vunpack.c.h.b16 %v293
        %v308 = vunpack.c.l.b16 %v294
        %v309 = vunpack.c.h.b16 %v294
        %v310 = vpack.c.b16 %v302, %v300
        %v311 = vpack.c.b16 %v303, %v301
        %v312 = vpack.c.b16 %v306, %v304
        %v313 = vpack.c.b16 %v307, %v305
        %v314 = vpack.c.b16 %v308, %v308
        %v315 = vpack.c.b16 %v309, %v309
        %vm320 = vcmask 293888
        %v322 = vsel %vm320, %v289, 0
        %vm324 = vcmask 1041408
        %v326 = vsel %vm324, %v314, 0
        %v329 = vsel %vm324, %v315, 0
        %331 = vmatprep.subr.bf16.mxu0 %v311
        %332 = vmatpush1.bf16.msra.mxu0 %v310
        %333 = vmatprep.subr.bf16.mxu0 %v313
        %334 = vmatpush1.bf16.msra.mxu0 %v312
        %335 = vmatprep.subr.bf16.mxu0 %v329
        %336 = vmatpush1.bf16.msra.mxu0 %v326
        %337 = vmatprep.subr.bf16.mxu0 0
        %338 = vmatpush1.bf16.msra.mxu0 0
        %339 = vmatprep.subr.bf16.mxu0 0
        %340 = vmatpush1.bf16.msra.mxu0 0
        %341 = vmatprep.subr.bf16.mxu0 0
        %342 = vmatpush1.bf16.msra.mxu0 0
        %343 = vmatprep.subr.bf16.mxu0 0
        %344 = vmatpush1.bf16.msra.mxu0 0
        %345 = vmatprep.subr.bf16.mxu0 0
        %346 = vmatpush1.bf16.msra.mxu0 0
        %347 = vmatprep.subr.bf16.mxu0 0
        %348 = vmatpush1.bf16.msra.mxu0 0
        %349 = vmatprep.subr.bf16.mxu0 0
        %350 = vmatpush1.bf16.msra.mxu0 0
        %351 = vmatprep.subr.bf16.mxu0 0
        %352 = vmatpush1.bf16.msra.mxu0 0
        %353 = vmatprep.subr.bf16.mxu0 0
        %354 = vmatpush1.bf16.msra.mxu0 0
        %355 = vmatprep.subr.bf16.mxu0 0
        %356 = vmatpush1.bf16.msra.mxu0 0
        %357 = vmatprep.subr.bf16.mxu0 0
        %358 = vmatpush1.bf16.msra.mxu0 0
        %359 = vmatprep.subr.bf16.mxu0 0
        %360 = vmatpush1.bf16.msra.mxu0 0
        %361 = vmatprep.subr.bf16.mxu0 0
        %362 = vmatpush1.bf16.msra.mxu0 0
        %363 = vmatprep.mubr.bf16.mxu0 0
        %364 = vmatmul.mubr.bf16.gmra.mrb[0].mxu0 %v322
        %v365 = vpop.f32.mrb[0].mxu0
        %v366 = vadd.f32 0.0, %v365
        %v367 = vpop.f32.mrb[0].mxu0
        %v368 = vadd.f32 0.0, %v367
        %v369 = vpop.f32.mrb[0].mxu0
        %v370 = vpop.f32.mrb[0].mxu0
        %371 = vdwg.mxu0
        %v372 = vadd.f32 %v287, %v366
        %v373 = vadd.f32 %v288, %v368
        %374 = vst [vmem:[#allocation2] sm:$0xff] %v372
        %375 = vst [vmem:[#allocation2 + $0x8] sm:$0xff] %v373
        // Predicated region
        $region37: #{tpu_custom_call.1} parent=31 // pred_check
          %p376 = pneg %p281
        $region38: #{tpu_custom_call.1} parent=31 // pred_check_branch
          %378 = sbr.rel (%p376) target = $region40
        $region39: #{tpu_custom_call.1} parent=31 // pred_region
          %v379 = vld [vmem:[#allocation2] sm:$0xff]
          %v380 = vld [vmem:[#allocation2 + $0x8] sm:$0xff]
          %v381 = vld [vmem:[%s278] sm:$0xff]
          %383 = vset.pattern.permute.xlu0 0
          %384 = vperm.xlu0 %383, %v381
          %v385 = vpop.permute.xlu0 %384
          %v387 = vadd.f32 %v379, %v385
          %v388 = vadd.f32 %v380, %v385
          %389 = vst [vmem:[%s251] sm:$0xff] %v387
          %390 = vst [vmem:[%s251 + $0x8] sm:$0xff] %v388
        $region40: #{tpu_custom_call.1} parent=31 // pred_fallthru
          _
        %s391 = sand.u32 %s139, 1
        %s392 = scalar_lea.sflag [#allocation4], %s391
        %s393 = sand.u32 %s139, 1
        %s394 = smul.addr %s393, 16
        %s395 = scalar_lea.vmem [#allocation3], %s394
        // Predicated region
        $region41: #{tpu_custom_call.1} parent=31 // pred_check
          %p396 = pneg %p149
        $region42: #{tpu_custom_call.1} parent=31 // pred_check_branch
          %398 = sbr.rel (%p396) target = $region44
        $region43: #{tpu_custom_call.1} parent=31 // pred_region
          %s399 = smul.u32 2, %s24
          %s401 = ssub.s32 256, 256
          %402 = vsyncadd %s392, %s401
          %s403 = smul.addr %s25, 2
          %s404 = sadd.s32 %s399, %s403
          %s405 = smul.addr %s23, 2
          %s406 = sadd.s32 %s404, %s405
          %s407 = smul.addr %s406, 128
          %s408 = scalar_lea.hbm %s3, %s407
          %s410 = sshll.u32 %s395, 4
          %s411 = int_to_ptr.vmem [resolvable:$true] %s410
          %413 = dma.vmem_to_hbm [thread:$0]  %s411, 256, %s408, %s392
        $region44: #{tpu_custom_call.1} parent=31 // pred_fallthru
          _
      $region32: #{tpu_custom_call.1} parent=5 // pred_fallthru
        _
      %p414 = scmp.le.s32.totalorder 2, %s12
      // Predicated region
      $region45: #{tpu_custom_call.1} parent=5 // pred_check
        %p415 = pneg %p414
      $region46: #{tpu_custom_call.1} parent=5 // pred_check_branch
        %417 = sbr.rel (%p415) target = $region48
      $region47: #{tpu_custom_call.1} parent=5 // pred_region
        %s418 = ssub.s32 %s12, 2
        // Predicated region
        $region49: #{tpu_custom_call.1} parent=47 // pred_check
          %p419 = pneg %p155
        $region50: #{tpu_custom_call.1} parent=47 // pred_check_branch
          %421 = sbr.rel (%p419) target = $region52
        $region51: #{tpu_custom_call.1} parent=47 // pred_region
          %s422 = sand.u32 %s140, 1
          %s423 = scalar_lea.sflag [#allocation4], %s422
          %s424 = sand.u32 %s140, 1
          %s425 = smul.addr %s424, 16
          %s426 = scalar_lea.vmem [#allocation3], %s425
          %427 = dma.done %s423, 256
        $region52: #{tpu_custom_call.1} parent=47 // pred_fallthru
          _
      $region48: #{tpu_custom_call.1} parent=5 // pred_fallthru
        _
    $region6: #{tpu_custom_call.1} parent=1 // loop_footer
      %s16 = sadd.s32 1, %s12
    $region7: #{tpu_custom_call.1} parent=1 // loop_footer_branch
      %11 = sbr.rel target = $region3
    $region8: #{tpu_custom_call.1} parent=1 // loop_exit
      _
    %428 = vsyncpa [#allocation4], 1
    %s429 = scalar_lea.sflag [#allocation4], 1
    %430 = vsyncpa %s429, 1

</llo_original>
